<compile_context>
chip_gen: v6e
topology: v6e:2x2x1
jax: 0.10.0
libtpu: 0.0.40
codegen_flags: <defaults>
</compile_context>

<pallas_src>
import functools

import numpy as np
import jax
import jax.numpy as jnp
from jax import lax
from jax.experimental import pallas as pl
from jax.experimental.pallas import tpu as pltpu

N_X = 2
N_U = 1
N_FEAT = 64
TS = 1.0        # ForwardEulerSimulator default ts
SCALE_DX = 1.0  # NeuralStateSpaceModel default scale_dx


def _round_up(x, m):
    return ((x + m - 1) // m) * m


def _rlc_sim_kernel(c_ref, w1x_ref, w2g_ref, b2g_ref, y_ref, x_state_ref,
                    *, chunk: int, unroll: int):
    # c_ref      : (chunk, 64) VMEM   C[t,:] = u[t]*W1[:,2] + b1   (time chunk, pipelined)
    # w1x_ref    : (2, 64)     VMEM   row j = W1[:, j]  (state columns of layer 1)
    # w2g_ref    : (2, 64)     VMEM   gain * W2
    # b2g_ref    : (2, 1)      VMEM   gain * b2
    # y_ref      : (chunk, 1)  VMEM   y[t] = x0 recorded BEFORE the Euler update
    # x_state_ref: (2, 64)     VMEM scratch, lane-broadcast state carried across chunks

    @pl.when(pl.program_id(0) == 0)
    def _():
        x_state_ref[...] = jnp.zeros_like(x_state_ref)   # x_0 = zeros(2)

    # Hoist every loop-invariant parameter load out of the recurrence.
    w1x0 = w1x_ref[0:1, :]          # (1, 64)
    w1x1 = w1x_ref[1:2, :]          # (1, 64)
    w2g0 = w2g_ref[0:1, :]          # (1, 64)
    w2g1 = w2g_ref[1:2, :]          # (1, 64)
    b2g0 = b2g_ref[0:1, :]          # (1, 1)
    b2g1 = b2g_ref[1:2, :]          # (1, 1)

    def body(i, carry):
        x0_v, x1_v = carry                                  # (1, 64) lane-broadcast vregs
        base = pl.multiple_of(i * unroll, unroll)
        for u in range(unroll):                              # manual unroll (trace-time)
            t = base + u
            # record x[0] BEFORE the Euler update (ForwardEulerSimulator semantics);
            # this store is off the carried dependence chain.
            y_ref[pl.ds(t, 1), :] = x0_v[:, 0:1]
            # hidden layer: h = relu(x0*W1[:,0] + x1*W1[:,1] + C[t])
            pre = x0_v * w1x0 + x1_v * w1x1 + c_ref[pl.ds(t, 1), :]
            h = jnp.maximum(pre, 0.0)
            # output layer (gain already folded into w2g/b2g); two keepdims lane
            # reduces issue back-to-back and pipeline through the XLU.
            d0 = jnp.sum(h * w2g0, axis=-1, keepdims=True) + b2g0   # (1, 1)
            d1 = jnp.sum(h * w2g1, axis=-1, keepdims=True) + b2g1   # (1, 1)
            # x <- x + ts*scale_dx*dx, staying in the vector domain (lane broadcast).
            x0_v = x0_v + d0
            x1_v = x1_v + d1
        return (x0_v, x1_v)

    x0_init = x_state_ref[0:1, :]
    x1_init = x_state_ref[1:2, :]
    x0_v, x1_v = lax.fori_loop(0, chunk // unroll, body, (x0_init, x1_init))

    # persist the state for the next time chunk
    x_state_ref[0:1, :] = x0_v
    x_state_ref[1:2, :] = x1_v


def state_space_wrapper_forward(u_in, w1, b1, w2, b2, *, time_chunk=256):
    """StateSpaceWrapper.forward.  u_in: (T, 1) f32 -> y_out: (T, 1) f32."""
    T = u_in.shape[0]
    f32 = jnp.float32
    u_flat = u_in.reshape(T).astype(f32)
    w1 = w1.astype(f32)   # (64, 3)  PyTorch Linear layout (out, in)
    b1 = b1.astype(f32)   # (64,)
    w2 = w2.astype(f32)   # (2, 64)
    b2 = b2.astype(f32)   # (2,)
    gain = f32(TS * SCALE_DX)

    # Precompute the state-independent hidden-layer term, vectorized over all T.
    c = u_flat[:, None] * w1[:, N_X][None, :] + b1[None, :]   # (T, 64)
    w1x = jnp.transpose(w1[:, :N_X])                          # (2, 64): rows W1[:,0], W1[:,1]
    w2g = gain * w2                                           # (2, 64): Euler gain folded in
    b2g = (gain * b2).reshape(N_X, 1)                         # (2, 1)

    # Time chunking: chunk is a multiple of the unroll factor (and of 8 for tiling).
    unroll = 8
    chunk = min(int(time_chunk), _round_up(T, unroll))
    chunk = _round_up(chunk, unroll)
    t_pad = _round_up(T, chunk)
    if t_pad != T:
        c = jnp.pad(c, ((0, t_pad - T), (0, 0)))              # padded steps are discarded
    num_chunks = t_pad // chunk

    kernel = functools.partial(_rlc_sim_kernel, chunk=chunk, unroll=unroll)
    y_pad = pl.pallas_call(
        kernel,
        out_shape=jax.ShapeDtypeStruct((t_pad, 1), f32),
        grid_spec=pltpu.PrefetchScalarGridSpec(
            num_scalar_prefetch=0,
            grid=(num_chunks,),
            in_specs=[
                pl.BlockSpec((chunk, N_FEAT), lambda i: (i, 0)),   # C chunk (pipelined)
                pl.BlockSpec((N_X, N_FEAT), lambda i: (0, 0)),     # w1x (VMEM resident)
                pl.BlockSpec((N_X, N_FEAT), lambda i: (0, 0)),     # w2g (VMEM resident)
                pl.BlockSpec((N_X, 1), lambda i: (0, 0)),          # b2g (VMEM resident)
            ],
            out_specs=pl.BlockSpec((chunk, 1), lambda i: (i, 0)),  # y chunk (pipelined)
            scratch_shapes=[pltpu.VMEM((N_X, N_FEAT), f32)],       # carried state
        ),
        compiler_params=pltpu.CompilerParams(
            dimension_semantics=("arbitrary",)),                    # serial recurrence
    )(c, w1x, w2g, b2g)
    return y_pad[:T]


def reference_forward(u_in, w1, b1, w2, b2):
    """Pure-JAX reference reproducing the PyTorch semantics step by step."""
    w1 = w1.astype(jnp.float32)
    b1 = b1.astype(jnp.float32)
    w2 = w2.astype(jnp.float32)
    b2 = b2.astype(jnp.float32)

    def step(x, u_t):
        y = x[0]
        h = jnp.maximum(x[0] * w1[:, 0] + x[1] * w1[:, 1] + u_t[0] * w1[:, 2] + b1, 0.0)
        dx0 = jnp.sum(h * w2[0, :]) + b2[0]
        dx1 = jnp.sum(h * w2[1, :]) + b2[1]
        dx = jnp.stack([dx0, dx1]) * SCALE_DX
        return x + TS * dx, y

    _, ys = lax.scan(step, jnp.zeros((N_X,), jnp.float32), u_in.astype(jnp.float32))
    return ys.reshape(-1, 1)


if __name__ == "__main__":
    key = jax.random.PRNGKey(0)
    k_u, k_w1, k_b1, k_w2, k_b2 = jax.random.split(key, 5)

    T = 600  # exercises multiple time chunks + tail padding
    u_in = jax.random.normal(k_u, (T, N_U), jnp.float32)

    # Deterministic parameter init (PyTorch Linear layout: W is (out, in)),
    # small output-layer weights like init_small=True in NeuralStateSpaceModel.
    w1 = 0.1 * jax.random.normal(k_w1, (N_FEAT, N_X + N_U), jnp.float32)  # (64, 3)
    b1 = 0.1 * jax.random.normal(k_b1, (N_FEAT,), jnp.float32)            # (64,)
    w2 = 1e-2 * jax.random.normal(k_w2, (N_X, N_FEAT), jnp.float32)       # (2, 64)
    b2 = 1e-2 * jax.random.normal(k_b2, (N_X,), jnp.float32)              # (2,)

    y_kernel = jax.block_until_ready(
        state_space_wrapper_forward(u_in, w1, b1, w2, b2))
    y_ref = jax.block_until_ready(reference_forward(u_in, w1, b1, w2, b2))

    assert y_kernel.shape == (T, 1)
    np.testing.assert_allclose(np.asarray(y_kernel), np.asarray(y_ref),
                               rtol=1e-4, atol=1e-5)
    print("KERNEL_OK")
</pallas_src>

<mosaic_0001>
module attributes {stable_mosaic.version = 11 : i64} {
  func.func @_rlc_sim_kernel(%arg0: i32, %arg1: memref<256x64xf32, #tpu.memory_space<vmem>>, %arg2: memref<2x64xf32, #tpu.memory_space<vmem>>, %arg3: memref<2x64xf32, #tpu.memory_space<vmem>>, %arg4: memref<2x1xf32, #tpu.memory_space<vmem>>, %arg5: memref<256x1xf32, #tpu.memory_space<vmem>>, %arg6: memref<2x64xf32, #tpu.memory_space<vmem>>) attributes {dimension_semantics = [#tpu.dimension_semantics<arbitrary>], iteration_bounds = array<i64: 3>, scalar_prefetch = 0 : i64, scratch_operands = 1 : i64, tpu.core_type = #tpu.core_type<tc>, window_params = [{transform_indices = @transform_0, window_bounds = array<i64: 256, 64>}, {pipeline_mode = #tpu.pipeline_mode<synchronous>, transform_indices = @transform_1, window_bounds = array<i64: 2, 64>}, {pipeline_mode = #tpu.pipeline_mode<synchronous>, transform_indices = @transform_2, window_bounds = array<i64: 2, 64>}, {pipeline_mode = #tpu.pipeline_mode<synchronous>, transform_indices = @transform_3, window_bounds = array<i64: 2, 1>}, {transform_indices = @transform_4, window_bounds = array<i64: 256, 1>}]} {
    %c0_i32 = arith.constant 0 : i32
    %0 = arith.cmpi eq, %arg0, %c0_i32 : i32
    %1 = arith.extui %0 : i1 to i32
    %c0_i32_0 = arith.constant 0 : i32
    %2 = arith.cmpi ne, %1, %c0_i32_0 : i32
    scf.if %2 {
      %cst = arith.constant 0.000000e+00 : f32
      %15 = vector.broadcast %cst : f32 to vector<2x64xf32>
      %c0_21 = arith.constant 0 : index
      %c0_22 = arith.constant 0 : index
      %16 = vector.load %arg6[%c0_21, %c0_22] : memref<2x64xf32, #tpu.memory_space<vmem>>, vector<2x64xf32>
      tpu.vector_store %arg6[%c0_21, %c0_22], %15 {strides = array<i32>} : memref<2x64xf32, #tpu.memory_space<vmem>>, vector<2x64xf32>,
    } else {
    }
    %c0 = arith.constant 0 : index
    %c0_1 = arith.constant 0 : index
    %3 = vector.load %arg2[%c0, %c0_1] : memref<2x64xf32, #tpu.memory_space<vmem>>, vector<1x64xf32>
    %c1 = arith.constant 1 : index
    %c0_2 = arith.constant 0 : index
    %4 = vector.load %arg2[%c1, %c0_2] : memref<2x64xf32, #tpu.memory_space<vmem>>, vector<1x64xf32>
    %c0_3 = arith.constant 0 : index
    %c0_4 = arith.constant 0 : index
    %5 = vector.load %arg3[%c0_3, %c0_4] : memref<2x64xf32, #tpu.memory_space<vmem>>, vector<1x64xf32>
    %c1_5 = arith.constant 1 : index
    %c0_6 = arith.constant 0 : index
    %6 = vector.load %arg3[%c1_5, %c0_6] : memref<2x64xf32, #tpu.memory_space<vmem>>, vector<1x64xf32>
    %c0_7 = arith.constant 0 : index
    %c0_8 = arith.constant 0 : index
    %7 = vector.load %arg4[%c0_7, %c0_8] : memref<2x1xf32, #tpu.memory_space<vmem>>, vector<1x1xf32>
    %c1_9 = arith.constant 1 : index
    %c0_10 = arith.constant 0 : index
    %8 = vector.load %arg4[%c1_9, %c0_10] : memref<2x1xf32, #tpu.memory_space<vmem>>, vector<1x1xf32>
    %c0_11 = arith.constant 0 : index
    %c0_12 = arith.constant 0 : index
    %9 = vector.load %arg6[%c0_11, %c0_12] : memref<2x64xf32, #tpu.memory_space<vmem>>, vector<1x64xf32>
    %c1_13 = arith.constant 1 : index
    %c0_14 = arith.constant 0 : index
    %10 = vector.load %arg6[%c1_13, %c0_14] : memref<2x64xf32, #tpu.memory_space<vmem>>, vector<1x64xf32>
    %c0_i32_15 = arith.constant 0 : i32
    %c32_i32 = arith.constant 32 : i32
    %11 = arith.addi %c0_i32_15, %c32_i32 : i32
    %c1_i32 = arith.constant 1 : i32
    %12:2 = scf.for %arg7 = %c0_i32_15 to %11 step %c1_i32 iter_args(%arg8 = %9, %arg9 = %10) -> (vector<1x64xf32>, vector<1x64xf32>)  : i32 {
      %c8_i32 = arith.constant 8 : i32
      %15 = arith.muli %arg7, %c8_i32 : i32
      %16 = tpu.assume_multiple %15, 8 : i32
      %c0_i32_21 = arith.constant 0 : i32
      %17 = arith.addi %16, %c0_i32_21 : i32
      %18 = vector.extract_strided_slice %arg8 {offsets = [0, 0], sizes = [1, 1], strides = [1, 1]} : vector<1x64xf32> to vector<1x1xf32>
      %19 = arith.index_cast %17 : i32 to index
      %c0_22 = arith.constant 0 : index
      %20 = vector.load %arg5[%19, %c0_22] : memref<256x1xf32, #tpu.memory_space<vmem>>, vector<1x1xf32>
      tpu.vector_store %arg5[%19, %c0_22], %18 {strides = array<i32>} : memref<256x1xf32, #tpu.memory_space<vmem>>, vector<1x1xf32>,
      %21 = arith.mulf %arg8, %3 : vector<1x64xf32>
      %22 = arith.mulf %arg9, %4 : vector<1x64xf32>
      %23 = arith.addf %21, %22 : vector<1x64xf32>
      %24 = arith.index_cast %17 : i32 to index
      %c0_23 = arith.constant 0 : index
      %25 = vector.load %arg1[%24, %c0_23] : memref<256x64xf32, #tpu.memory_space<vmem>>, vector<1x64xf32>
      %26 = arith.addf %23, %25 : vector<1x64xf32>
      %cst = arith.constant 0.000000e+00 : f32
      %27 = vector.broadcast %cst : f32 to vector<1x64xf32>
      %28 = arith.maximumf %26, %27 : vector<1x64xf32>
      %29 = arith.mulf %28, %5 : vector<1x64xf32>
      %cst_24 = arith.constant dense<0.000000e+00> : vector<1xf32>
      %30 = vector.multi_reduction <add>, %29, %cst_24 [1] : vector<1x64xf32> to vector<1xf32>
      %31 = vector.shape_cast %30 : vector<1xf32> to vector<1x1xf32>
      %32 = arith.addf %31, %7 : vector<1x1xf32>
      %33 = arith.mulf %28, %6 : vector<1x64xf32>
      %cst_25 = arith.constant dense<0.000000e+00> : vector<1xf32>
      %34 = vector.multi_reduction <add>, %33, %cst_25 [1] : vector<1x64xf32> to vector<1xf32>
      %35 = vector.shape_cast %34 : vector<1xf32> to vector<1x1xf32>
      %36 = arith.addf %35, %8 : vector<1x1xf32>
      %37 = vector.broadcast %32 : vector<1x1xf32> to vector<1x64xf32>
      %38 = arith.addf %arg8, %37 : vector<1x64xf32>
      %39 = vector.broadcast %36 : vector<1x1xf32> to vector<1x64xf32>
      %40 = arith.addf %arg9, %39 : vector<1x64xf32>
      %c1_i32_26 = arith.constant 1 : i32
      %41 = arith.addi %16, %c1_i32_26 : i32
      %42 = vector.extract_strided_slice %38 {offsets = [0, 0], sizes = [1, 1], strides = [1, 1]} : vector<1x64xf32> to vector<1x1xf32>
      %43 = arith.index_cast %41 : i32 to index
      %c0_27 = arith.constant 0 : index
      %44 = vector.load %arg5[%43, %c0_27] : memref<256x1xf32, #tpu.memory_space<vmem>>, vector<1x1xf32>
      tpu.vector_store %arg5[%43, %c0_27], %42 {strides = array<i32>} : memref<256x1xf32, #tpu.memory_space<vmem>>, vector<1x1xf32>,
      %45 = arith.mulf %38, %3 : vector<1x64xf32>
      %46 = arith.mulf %40, %4 : vector<1x64xf32>
      %47 = arith.addf %45, %46 : vector<1x64xf32>
      %48 = arith.index_cast %41 : i32 to index
      %c0_28 = arith.constant 0 : index
      %49 = vector.load %arg1[%48, %c0_28] : memref<256x64xf32, #tpu.memory_space<vmem>>, vector<1x64xf32>
      %50 = arith.addf %47, %49 : vector<1x64xf32>
      %cst_29 = arith.constant 0.000000e+00 : f32
      %51 = vector.broadcast %cst_29 : f32 to vector<1x64xf32>
      %52 = arith.maximumf %50, %51 : vector<1x64xf32>
      %53 = arith.mulf %52, %5 : vector<1x64xf32>
      %cst_30 = arith.constant dense<0.000000e+00> : vector<1xf32>
      %54 = vector.multi_reduction <add>, %53, %cst_30 [1] : vector<1x64xf32> to vector<1xf32>
      %55 = vector.shape_cast %54 : vector<1xf32> to vector<1x1xf32>
      %56 = arith.addf %55, %7 : vector<1x1xf32>
      %57 = arith.mulf %52, %6 : vector<1x64xf32>
      %cst_31 = arith.constant dense<0.000000e+00> : vector<1xf32>
      %58 = vector.multi_reduction <add>, %57, %cst_31 [1] : vector<1x64xf32> to vector<1xf32>
      %59 = vector.shape_cast %58 : vector<1xf32> to vector<1x1xf32>
      %60 = arith.addf %59, %8 : vector<1x1xf32>
      %61 = vector.broadcast %56 : vector<1x1xf32> to vector<1x64xf32>
      %62 = arith.addf %38, %61 : vector<1x64xf32>
      %63 = vector.broadcast %60 : vector<1x1xf32> to vector<1x64xf32>
      %64 = arith.addf %40, %63 : vector<1x64xf32>
      %c2_i32 = arith.constant 2 : i32
      %65 = arith.addi %16, %c2_i32 : i32
      %66 = vector.extract_strided_slice %62 {offsets = [0, 0], sizes = [1, 1], strides = [1, 1]} : vector<1x64xf32> to vector<1x1xf32>
      %67 = arith.index_cast %65 : i32 to index
      %c0_32 = arith.constant 0 : index
      %68 = vector.load %arg5[%67, %c0_32] : memref<256x1xf32, #tpu.memory_space<vmem>>, vector<1x1xf32>
      tpu.vector_store %arg5[%67, %c0_32], %66 {strides = array<i32>} : memref<256x1xf32, #tpu.memory_space<vmem>>, vector<1x1xf32>,
      %69 = arith.mulf %62, %3 : vector<1x64xf32>
      %70 = arith.mulf %64, %4 : vector<1x64xf32>
      %71 = arith.addf %69, %70 : vector<1x64xf32>
      %72 = arith.index_cast %65 : i32 to index
      %c0_33 = arith.constant 0 : index
      %73 = vector.load %arg1[%72, %c0_33] : memref<256x64xf32, #tpu.memory_space<vmem>>, vector<1x64xf32>
      %74 = arith.addf %71, %73 : vector<1x64xf32>
      %cst_34 = arith.constant 0.000000e+00 : f32
      %75 = vector.broadcast %cst_34 : f32 to vector<1x64xf32>
      %76 = arith.maximumf %74, %75 : vector<1x64xf32>
      %77 = arith.mulf %76, %5 : vector<1x64xf32>
      %cst_35 = arith.constant dense<0.000000e+00> : vector<1xf32>
      %78 = vector.multi_reduction <add>, %77, %cst_35 [1] : vector<1x64xf32> to vector<1xf32>
      %79 = vector.shape_cast %78 : vector<1xf32> to vector<1x1xf32>
      %80 = arith.addf %79, %7 : vector<1x1xf32>
      %81 = arith.mulf %76, %6 : vector<1x64xf32>
      %cst_36 = arith.constant dense<0.000000e+00> : vector<1xf32>
      %82 = vector.multi_reduction <add>, %81, %cst_36 [1] : vector<1x64xf32> to vector<1xf32>
      %83 = vector.shape_cast %82 : vector<1xf32> to vector<1x1xf32>
      %84 = arith.addf %83, %8 : vector<1x1xf32>
      %85 = vector.broadcast %80 : vector<1x1xf32> to vector<1x64xf32>
      %86 = arith.addf %62, %85 : vector<1x64xf32>
      %87 = vector.broadcast %84 : vector<1x1xf32> to vector<1x64xf32>
      %88 = arith.addf %64, %87 : vector<1x64xf32>
      %c3_i32 = arith.constant 3 : i32
      %89 = arith.addi %16, %c3_i32 : i32
      %90 = vector.extract_strided_slice %86 {offsets = [0, 0], sizes = [1, 1], strides = [1, 1]} : vector<1x64xf32> to vector<1x1xf32>
      %91 = arith.index_cast %89 : i32 to index
      %c0_37 = arith.constant 0 : index
      %92 = vector.load %arg5[%91, %c0_37] : memref<256x1xf32, #tpu.memory_space<vmem>>, vector<1x1xf32>
      tpu.vector_store %arg5[%91, %c0_37], %90 {strides = array<i32>} : memref<256x1xf32, #tpu.memory_space<vmem>>, vector<1x1xf32>,
      %93 = arith.mulf %86, %3 : vector<1x64xf32>
      %94 = arith.mulf %88, %4 : vector<1x64xf32>
      %95 = arith.addf %93, %94 : vector<1x64xf32>
      %96 = arith.index_cast %89 : i32 to index
      %c0_38 = arith.constant 0 : index
      %97 = vector.load %arg1[%96, %c0_38] : memref<256x64xf32, #tpu.memory_space<vmem>>, vector<1x64xf32>
      %98 = arith.addf %95, %97 : vector<1x64xf32>
      %cst_39 = arith.constant 0.000000e+00 : f32
      %99 = vector.broadcast %cst_39 : f32 to vector<1x64xf32>
      %100 = arith.maximumf %98, %99 : vector<1x64xf32>
      %101 = arith.mulf %100, %5 : vector<1x64xf32>
      %cst_40 = arith.constant dense<0.000000e+00> : vector<1xf32>
      %102 = vector.multi_reduction <add>, %101, %cst_40 [1] : vector<1x64xf32> to vector<1xf32>
      %103 = vector.shape_cast %102 : vector<1xf32> to vector<1x1xf32>
      %104 = arith.addf %103, %7 : vector<1x1xf32>
      %105 = arith.mulf %100, %6 : vector<1x64xf32>
      %cst_41 = arith.constant dense<0.000000e+00> : vector<1xf32>
      %106 = vector.multi_reduction <add>, %105, %cst_41 [1] : vector<1x64xf32> to vector<1xf32>
      %107 = vector.shape_cast %106 : vector<1xf32> to vector<1x1xf32>
      %108 = arith.addf %107, %8 : vector<1x1xf32>
      %109 = vector.broadcast %104 : vector<1x1xf32> to vector<1x64xf32>
      %110 = arith.addf %86, %109 : vector<1x64xf32>
      %111 = vector.broadcast %108 : vector<1x1xf32> to vector<1x64xf32>
      %112 = arith.addf %88, %111 : vector<1x64xf32>
      %c4_i32 = arith.constant 4 : i32
      %113 = arith.addi %16, %c4_i32 : i32
      %114 = vector.extract_strided_slice %110 {offsets = [0, 0], sizes = [1, 1], strides = [1, 1]} : vector<1x64xf32> to vector<1x1xf32>
      %115 = arith.index_cast %113 : i32 to index
      %c0_42 = arith.constant 0 : index
      %116 = vector.load %arg5[%115, %c0_42] : memref<256x1xf32, #tpu.memory_space<vmem>>, vector<1x1xf32>
      tpu.vector_store %arg5[%115, %c0_42], %114 {strides = array<i32>} : memref<256x1xf32, #tpu.memory_space<vmem>>, vector<1x1xf32>,
      %117 = arith.mulf %110, %3 : vector<1x64xf32>
      %118 = arith.mulf %112, %4 : vector<1x64xf32>
      %119 = arith.addf %117, %118 : vector<1x64xf32>
      %120 = arith.index_cast %113 : i32 to index
      %c0_43 = arith.constant 0 : index
      %121 = vector.load %arg1[%120, %c0_43] : memref<256x64xf32, #tpu.memory_space<vmem>>, vector<1x64xf32>
      %122 = arith.addf %119, %121 : vector<1x64xf32>
      %cst_44 = arith.constant 0.000000e+00 : f32
      %123 = vector.broadcast %cst_44 : f32 to vector<1x64xf32>
      %124 = arith.maximumf %122, %123 : vector<1x64xf32>
      %125 = arith.mulf %124, %5 : vector<1x64xf32>
      %cst_45 = arith.constant dense<0.000000e+00> : vector<1xf32>
      %126 = vector.multi_reduction <add>, %125, %cst_45 [1] : vector<1x64xf32> to vector<1xf32>
      %127 = vector.shape_cast %126 : vector<1xf32> to vector<1x1xf32>
      %128 = arith.addf %127, %7 : vector<1x1xf32>
      %129 = arith.mulf %124, %6 : vector<1x64xf32>
      %cst_46 = arith.constant dense<0.000000e+00> : vector<1xf32>
      %130 = vector.multi_reduction <add>, %129, %cst_46 [1] : vector<1x64xf32> to vector<1xf32>
      %131 = vector.shape_cast %130 : vector<1xf32> to vector<1x1xf32>
      %132 = arith.addf %131, %8 : vector<1x1xf32>
      %133 = vector.broadcast %128 : vector<1x1xf32> to vector<1x64xf32>
      %134 = arith.addf %110, %133 : vector<1x64xf32>
      %135 = vector.broadcast %132 : vector<1x1xf32> to vector<1x64xf32>
      %136 = arith.addf %112, %135 : vector<1x64xf32>
      %c5_i32 = arith.constant 5 : i32
      %137 = arith.addi %16, %c5_i32 : i32
      %138 = vector.extract_strided_slice %134 {offsets = [0, 0], sizes = [1, 1], strides = [1, 1]} : vector<1x64xf32> to vector<1x1xf32>
      %139 = arith.index_cast %137 : i32 to index
      %c0_47 = arith.constant 0 : index
      %140 = vector.load %arg5[%139, %c0_47] : memref<256x1xf32, #tpu.memory_space<vmem>>, vector<1x1xf32>
      tpu.vector_store %arg5[%139, %c0_47], %138 {strides = array<i32>} : memref<256x1xf32, #tpu.memory_space<vmem>>, vector<1x1xf32>,
      %141 = arith.mulf %134, %3 : vector<1x64xf32>
      %142 = arith.mulf %136, %4 : vector<1x64xf32>
      %143 = arith.addf %141, %142 : vector<1x64xf32>
      %144 = arith.index_cast %137 : i32 to index
      %c0_48 = arith.constant 0 : index
      %145 = vector.load %arg1[%144, %c0_48] : memref<256x64xf32, #tpu.memory_space<vmem>>, vector<1x64xf32>
      %146 = arith.addf %143, %145 : vector<1x64xf32>
      %cst_49 = arith.constant 0.000000e+00 : f32
      %147 = vector.broadcast %cst_49 : f32 to vector<1x64xf32>
      %148 = arith.maximumf %146, %147 : vector<1x64xf32>
      %149 = arith.mulf %148, %5 : vector<1x64xf32>
      %cst_50 = arith.constant dense<0.000000e+00> : vector<1xf32>
      %150 = vector.multi_reduction <add>, %149, %cst_50 [1] : vector<1x64xf32> to vector<1xf32>
      %151 = vector.shape_cast %150 : vector<1xf32> to vector<1x1xf32>
      %152 = arith.addf %151, %7 : vector<1x1xf32>
      %153 = arith.mulf %148, %6 : vector<1x64xf32>
      %cst_51 = arith.constant dense<0.000000e+00> : vector<1xf32>
      %154 = vector.multi_reduction <add>, %153, %cst_51 [1] : vector<1x64xf32> to vector<1xf32>
      %155 = vector.shape_cast %154 : vector<1xf32> to vector<1x1xf32>
      %156 = arith.addf %155, %8 : vector<1x1xf32>
      %157 = vector.broadcast %152 : vector<1x1xf32> to vector<1x64xf32>
      %158 = arith.addf %134, %157 : vector<1x64xf32>
      %159 = vector.broadcast %156 : vector<1x1xf32> to vector<1x64xf32>
      %160 = arith.addf %136, %159 : vector<1x64xf32>
      %c6_i32 = arith.constant 6 : i32
      %161 = arith.addi %16, %c6_i32 : i32
      %162 = vector.extract_strided_slice %158 {offsets = [0, 0], sizes = [1, 1], strides = [1, 1]} : vector<1x64xf32> to vector<1x1xf32>
      %163 = arith.index_cast %161 : i32 to index
      %c0_52 = arith.constant 0 : index
      %164 = vector.load %arg5[%163, %c0_52] : memref<256x1xf32, #tpu.memory_space<vmem>>, vector<1x1xf32>
      tpu.vector_store %arg5[%163, %c0_52], %162 {strides = array<i32>} : memref<256x1xf32, #tpu.memory_space<vmem>>, vector<1x1xf32>,
      %165 = arith.mulf %158, %3 : vector<1x64xf32>
      %166 = arith.mulf %160, %4 : vector<1x64xf32>
      %167 = arith.addf %165, %166 : vector<1x64xf32>
      %168 = arith.index_cast %161 : i32 to index
      %c0_53 = arith.constant 0 : index
      %169 = vector.load %arg1[%168, %c0_53] : memref<256x64xf32, #tpu.memory_space<vmem>>, vector<1x64xf32>
      %170 = arith.addf %167, %169 : vector<1x64xf32>
      %cst_54 = arith.constant 0.000000e+00 : f32
      %171 = vector.broadcast %cst_54 : f32 to vector<1x64xf32>
      %172 = arith.maximumf %170, %171 : vector<1x64xf32>
      %173 = arith.mulf %172, %5 : vector<1x64xf32>
      %cst_55 = arith.constant dense<0.000000e+00> : vector<1xf32>
      %174 = vector.multi_reduction <add>, %173, %cst_55 [1] : vector<1x64xf32> to vector<1xf32>
      %175 = vector.shape_cast %174 : vector<1xf32> to vector<1x1xf32>
      %176 = arith.addf %175, %7 : vector<1x1xf32>
      %177 = arith.mulf %172, %6 : vector<1x64xf32>
      %cst_56 = arith.constant dense<0.000000e+00> : vector<1xf32>
      %178 = vector.multi_reduction <add>, %177, %cst_56 [1] : vector<1x64xf32> to vector<1xf32>
      %179 = vector.shape_cast %178 : vector<1xf32> to vector<1x1xf32>
      %180 = arith.addf %179, %8 : vector<1x1xf32>
      %181 = vector.broadcast %176 : vector<1x1xf32> to vector<1x64xf32>
      %182 = arith.addf %158, %181 : vector<1x64xf32>
      %183 = vector.broadcast %180 : vector<1x1xf32> to vector<1x64xf32>
      %184 = arith.addf %160, %183 : vector<1x64xf32>
      %c7_i32 = arith.constant 7 : i32
      %185 = arith.addi %16, %c7_i32 : i32
      %186 = vector.extract_strided_slice %182 {offsets = [0, 0], sizes = [1, 1], strides = [1, 1]} : vector<1x64xf32> to vector<1x1xf32>
      %187 = arith.index_cast %185 : i32 to index
      %c0_57 = arith.constant 0 : index
      %188 = vector.load %arg5[%187, %c0_57] : memref<256x1xf32, #tpu.memory_space<vmem>>, vector<1x1xf32>
      tpu.vector_store %arg5[%187, %c0_57], %186 {strides = array<i32>} : memref<256x1xf32, #tpu.memory_space<vmem>>, vector<1x1xf32>,
      %189 = arith.mulf %182, %3 : vector<1x64xf32>
      %190 = arith.mulf %184, %4 : vector<1x64xf32>
      %191 = arith.addf %189, %190 : vector<1x64xf32>
      %192 = arith.index_cast %185 : i32 to index
      %c0_58 = arith.constant 0 : index
      %193 = vector.load %arg1[%192, %c0_58] : memref<256x64xf32, #tpu.memory_space<vmem>>, vector<1x64xf32>
      %194 = arith.addf %191, %193 : vector<1x64xf32>
      %cst_59 = arith.constant 0.000000e+00 : f32
      %195 = vector.broadcast %cst_59 : f32 to vector<1x64xf32>
      %196 = arith.maximumf %194, %195 : vector<1x64xf32>
      %197 = arith.mulf %196, %5 : vector<1x64xf32>
      %cst_60 = arith.constant dense<0.000000e+00> : vector<1xf32>
      %198 = vector.multi_reduction <add>, %197, %cst_60 [1] : vector<1x64xf32> to vector<1xf32>
      %199 = vector.shape_cast %198 : vector<1xf32> to vector<1x1xf32>
      %200 = arith.addf %199, %7 : vector<1x1xf32>
      %201 = arith.mulf %196, %6 : vector<1x64xf32>
      %cst_61 = arith.constant dense<0.000000e+00> : vector<1xf32>
      %202 = vector.multi_reduction <add>, %201, %cst_61 [1] : vector<1x64xf32> to vector<1xf32>
      %203 = vector.shape_cast %202 : vector<1xf32> to vector<1x1xf32>
      %204 = arith.addf %203, %8 : vector<1x1xf32>
      %205 = vector.broadcast %200 : vector<1x1xf32> to vector<1x64xf32>
      %206 = arith.addf %182, %205 : vector<1x64xf32>
      %207 = vector.broadcast %204 : vector<1x1xf32> to vector<1x64xf32>
      %208 = arith.addf %184, %207 : vector<1x64xf32>
      scf.yield %206, %208 : vector<1x64xf32>, vector<1x64xf32>
    }
    %c32_i32_16 = arith.constant 32 : i32
    %c0_17 = arith.constant 0 : index
    %c0_18 = arith.constant 0 : index
    %13 = vector.load %arg6[%c0_17, %c0_18] : memref<2x64xf32, #tpu.memory_space<vmem>>, vector<1x64xf32>
    tpu.vector_store %arg6[%c0_17, %c0_18], %12#0 {strides = array<i32>} : memref<2x64xf32, #tpu.memory_space<vmem>>, vector<1x64xf32>,
    %c1_19 = arith.constant 1 : index
    %c0_20 = arith.constant 0 : index
    %14 = vector.load %arg6[%c1_19, %c0_20] : memref<2x64xf32, #tpu.memory_space<vmem>>, vector<1x64xf32>
    tpu.vector_store %arg6[%c1_19, %c0_20], %12#1 {strides = array<i32>} : memref<2x64xf32, #tpu.memory_space<vmem>>, vector<1x64xf32>,
    return
  }
  func.func @transform_0(%arg0: i32) -> (i32, i32) {
    %c0_i32 = arith.constant 0 : i32
    %c0_i32_0 = arith.constant 0 : i32
    return %arg0, %c0_i32 : i32, i32
  }
  func.func @transform_1(%arg0: i32) -> (i32, i32) {
    %c0_i32 = arith.constant 0 : i32
    %c0_i32_0 = arith.constant 0 : i32
    %c0_i32_1 = arith.constant 0 : i32
    return %c0_i32, %c0_i32_0 : i32, i32
  }
  func.func @transform_2(%arg0: i32) -> (i32, i32) {
    %c0_i32 = arith.constant 0 : i32
    %c0_i32_0 = arith.constant 0 : i32
    %c0_i32_1 = arith.constant 0 : i32
    return %c0_i32, %c0_i32_0 : i32, i32
  }
  func.func @transform_3(%arg0: i32) -> (i32, i32) {
    %c0_i32 = arith.constant 0 : i32
    %c0_i32_0 = arith.constant 0 : i32
    %c0_i32_1 = arith.constant 0 : i32
    return %c0_i32, %c0_i32_0 : i32, i32
  }
  func.func @transform_4(%arg0: i32) -> (i32, i32) {
    %c0_i32 = arith.constant 0 : i32
    %c0_i32_0 = arith.constant 0 : i32
    return %arg0, %c0_i32 : i32, i32
  }
}

</mosaic_0001>

<llo_original>
// kernel: tpu_custom_call.1
$region0: #{tpu_custom_call.1}
  #allocation0 [shape = 'u32[]', space=smem, size = 0x4, offset = 0x4, fixed_abs, tag = 'smem constant byte address 0x4 - core index']
  #allocation1 [shape = 'u32[144,128]{1,0:T(1,128)}', space=vmem, size = 0x12000, scoped, tag = 'internal scratch']
  #allocation2 [shape = 'f32[2,64]{1,0:T(2,128)}', space=vmem, size = 0x400, scoped, tag = 'scratch operand']
  %s0 = inlined_call_operand.vmem [shape: f32[768,64], index: 0, kind: input, shape index: {}]
  %s1 = inlined_call_operand.vmem [shape: f32[2,64], index: 1, kind: input, shape index: {}]
  %s2 = inlined_call_operand.vmem [shape: f32[2,64], index: 2, kind: input, shape index: {}]
  %s3 = inlined_call_operand.vmem [shape: f32[2,1], index: 3, kind: input, shape index: {}]
  %s4 = inlined_call_operand.vmem [shape: f32[768,1], index: 4, kind: output, shape index: {}]
  %s5 = sld [smem:[#allocation0]]
  $region60: #{tpu_custom_call.1} parent=0
    _
  %s7 = ssub.s32 1, %s5
  %s8 = scalar_select 0, %s7, %s5
  loop: start=0, step=1, limit=5
  $region2: #{tpu_custom_call.1} parent=0 // loop_pre_header
    _
  $region3: #{tpu_custom_call.1} parent=0 // loop_header
    %s10 = sphi 0, %s14
    %p11 = scmp.ge.s32.totalorder %s10, 5
    %s20 = sphi 0, %s22
    %s23 = sphi 0, %s20
    %s24 = sphi 0, %s23
    %s40 = sphi 0, %s24
    %s44 = sphi 0, %s44
    %s46 = sphi 0, %s44
    %s47 = sphi 0, %s46
    %s61 = sphi 0, %s47
    %s65 = sphi 0, %s65
    %s67 = sphi 0, %s65
    %s68 = sphi 0, %s67
    %s82 = sphi 0, %s68
    %s86 = sphi 0, %s86
    %s88 = sphi 0, %s86
    %s89 = sphi 0, %s88
    %s103 = sphi 0, %s89
    %s109 = sphi 0, %s111
    %s112 = sphi 0, %s109
    %s113 = sphi 0, %s112
    %s129 = sphi 0, %s113
  $region4: #{tpu_custom_call.1} parent=0 // loop_header_branch
    %13 = sbr.rel (%p11) target = $region8
  $region5: #{tpu_custom_call.1} parent=0 // loop_body
    %s15 = ssub.s32 %s10, 1
    %s16 = ssub.s32 %s10, 2
    %s17 = sadd.s32 %s10, 1
    %s18 = ssub.s32 %s10, %s17
    %p19 = scmp.eq.s32.totalorder %s18, 0
    %s21 = sadd.s32 %s20, 1
    %s22 = scalar_select %p19, %s20, %s21
    %p25 = pneg %p19
    %p26 = scmp.eq.s32.totalorder %s10, 2
    %p27 = por %p25, %p26
    %p28 = scmp.ne.s32.totalorder %s20, %s23
    %p29 = scmp.eq.s32.totalorder %s10, 0
    %p30 = por %p28, %p29
    %p31 = scmp.ne.s32.totalorder %s20, %s23
    %p32 = scmp.eq.s32.totalorder %s15, 2
    %p33 = por %p31, %p32
    %p34 = scmp.ne.s32.totalorder %s23, %s24
    %p35 = scmp.eq.s32.totalorder %s15, 0
    %p36 = por %p34, %p35
    %p37 = scmp.ne.s32.totalorder %s23, %s24
    %p38 = scmp.eq.s32.totalorder %s16, 2
    %p39 = por %p37, %p38
    %p41 = scmp.ne.s32.totalorder %s24, %s40
    %p42 = scmp.eq.s32.totalorder %s16, 0
    %p43 = por %p41, %p42
    %s45 = sadd.s32 %s44, 1
    %p48 = scmp.eq.s32.totalorder %s10, 2
    %p49 = scmp.ne.s32.totalorder %s44, %s46
    %p50 = scmp.eq.s32.totalorder %s10, 0
    %p51 = por %p49, %p50
    %p52 = scmp.ne.s32.totalorder %s44, %s46
    %p53 = scmp.eq.s32.totalorder %s15, 2
    %p54 = por %p52, %p53
    %p55 = scmp.ne.s32.totalorder %s46, %s47
    %p56 = scmp.eq.s32.totalorder %s15, 0
    %p57 = por %p55, %p56
    %p58 = scmp.ne.s32.totalorder %s46, %s47
    %p59 = scmp.eq.s32.totalorder %s16, 2
    %p60 = por %p58, %p59
    %p62 = scmp.ne.s32.totalorder %s47, %s61
    %p63 = scmp.eq.s32.totalorder %s16, 0
    %p64 = por %p62, %p63
    %s66 = sadd.s32 %s65, 1
    %p69 = scmp.eq.s32.totalorder %s10, 2
    %p70 = scmp.ne.s32.totalorder %s65, %s67
    %p71 = scmp.eq.s32.totalorder %s10, 0
    %p72 = por %p70, %p71
    %p73 = scmp.ne.s32.totalorder %s65, %s67
    %p74 = scmp.eq.s32.totalorder %s15, 2
    %p75 = por %p73, %p74
    %p76 = scmp.ne.s32.totalorder %s67, %s68
    %p77 = scmp.eq.s32.totalorder %s15, 0
    %p78 = por %p76, %p77
    %p79 = scmp.ne.s32.totalorder %s67, %s68
    %p80 = scmp.eq.s32.totalorder %s16, 2
    %p81 = por %p79, %p80
    %p83 = scmp.ne.s32.totalorder %s68, %s82
    %p84 = scmp.eq.s32.totalorder %s16, 0
    %p85 = por %p83, %p84
    %s87 = sadd.s32 %s86, 1
    %p90 = scmp.eq.s32.totalorder %s10, 2
    %p91 = scmp.ne.s32.totalorder %s86, %s88
    %p92 = scmp.eq.s32.totalorder %s10, 0
    %p93 = por %p91, %p92
    %p94 = scmp.ne.s32.totalorder %s86, %s88
    %p95 = scmp.eq.s32.totalorder %s15, 2
    %p96 = por %p94, %p95
    %p97 = scmp.ne.s32.totalorder %s88, %s89
    %p98 = scmp.eq.s32.totalorder %s15, 0
    %p99 = por %p97, %p98
    %p100 = scmp.ne.s32.totalorder %s88, %s89
    %p101 = scmp.eq.s32.totalorder %s16, 2
    %p102 = por %p100, %p101
    %p104 = scmp.ne.s32.totalorder %s89, %s103
    %p105 = scmp.eq.s32.totalorder %s16, 0
    %p106 = por %p104, %p105
    %s107 = ssub.s32 %s10, %s17
    %p108 = scmp.eq.s32.totalorder %s107, 0
    %s110 = sadd.s32 %s109, 1
    %s111 = scalar_select %p108, %s109, %s110
    %p114 = pneg %p108
    %p115 = scmp.eq.s32.totalorder %s10, 2
    %p116 = por %p114, %p115
    %p117 = scmp.ne.s32.totalorder %s109, %s112
    %p118 = scmp.eq.s32.totalorder %s10, 0
    %p119 = por %p117, %p118
    %p120 = scmp.ne.s32.totalorder %s109, %s112
    %p121 = scmp.eq.s32.totalorder %s15, 2
    %p122 = por %p120, %p121
    %p123 = scmp.ne.s32.totalorder %s112, %s113
    %p124 = scmp.eq.s32.totalorder %s15, 0
    %p125 = por %p123, %p124
    %p126 = scmp.ne.s32.totalorder %s112, %s113
    %p127 = scmp.eq.s32.totalorder %s16, 2
    %p128 = por %p126, %p127
    %p130 = scmp.ne.s32.totalorder %s113, %s129
    %p131 = scmp.eq.s32.totalorder %s16, 0
    %p132 = por %p130, %p131
    %p133 = scmp.le.s32.totalorder 1, %s10
    %p134 = scmp.lt.s32.totalorder %s10, 4
    %p135 = pnand %p133, %p134
    %p136 = pneg %p135
    // Predicated region
    $region9: #{tpu_custom_call.1} parent=5 // pred_check
      _
    $region10: #{tpu_custom_call.1} parent=5 // pred_check_branch
      %138 = sbr.rel (%p135) target = $region12
    $region11: #{tpu_custom_call.1} parent=5 // pred_region
      %s139 = ssub.s32 %s10, 1
      // Predicated region
      $region13: #{tpu_custom_call.1} parent=11 // pred_check
        %p140 = pneg %p57
      $region14: #{tpu_custom_call.1} parent=11 // pred_check_branch
        %142 = sbr.rel (%p140) target = $region16
      $region15: #{tpu_custom_call.1} parent=11 // pred_region
        _
      $region16: #{tpu_custom_call.1} parent=11 // pred_fallthru
        _
      // Predicated region
      $region17: #{tpu_custom_call.1} parent=11 // pred_check
        %p143 = pneg %p78
      $region18: #{tpu_custom_call.1} parent=11 // pred_check_branch
        %145 = sbr.rel (%p143) target = $region20
      $region19: #{tpu_custom_call.1} parent=11 // pred_region
        _
      $region20: #{tpu_custom_call.1} parent=11 // pred_fallthru
        _
      // Predicated region
      $region21: #{tpu_custom_call.1} parent=11 // pred_check
        %p146 = pneg %p99
      $region22: #{tpu_custom_call.1} parent=11 // pred_check_branch
        %148 = sbr.rel (%p146) target = $region24
      $region23: #{tpu_custom_call.1} parent=11 // pred_region
        _
      $region24: #{tpu_custom_call.1} parent=11 // pred_fallthru
        _
    $region12: #{tpu_custom_call.1} parent=5 // pred_fallthru
      _
    %p149 = scmp.lt.s32.totalorder %s10, 3
    // Predicated region
    $region25: #{tpu_custom_call.1} parent=5 // pred_check
      %p150 = pneg %p149
    $region26: #{tpu_custom_call.1} parent=5 // pred_check_branch
      %152 = sbr.rel (%p150) target = $region28
    $region27: #{tpu_custom_call.1} parent=5 // pred_region
      // Predicated region
      $region29: #{tpu_custom_call.1} parent=27 // pred_check
        %p153 = pneg %p30
      $region30: #{tpu_custom_call.1} parent=27 // pred_check_branch
        %155 = sbr.rel (%p153) target = $region32
      $region31: #{tpu_custom_call.1} parent=27 // pred_region
        %s156 = smul.u32 32, %s10
        %p157 = scmp.lt.s32.totalorder %s156, 95
        %s158 = scalar_select %p157, %s156, 95
        %s159 = smul.addr %s158, 8
        %s160 = scalar_lea.vmem %s0, %s159
        %s161 = smul.u32 32, %s10
      $region32: #{tpu_custom_call.1} parent=27 // pred_fallthru
        _
    $region28: #{tpu_custom_call.1} parent=5 // pred_fallthru
      _
    %p162 = scmp.le.s32.totalorder 1, %s10
    %p163 = scmp.lt.s32.totalorder %s10, 4
    %p164 = pnand %p162, %p163
    %p165 = pneg %p164
    // Predicated region
    $region33: #{tpu_custom_call.1} parent=5 // pred_check
      _
    $region34: #{tpu_custom_call.1} parent=5 // pred_check_branch
      %167 = sbr.rel (%p164) target = $region36
    $region35: #{tpu_custom_call.1} parent=5 // pred_region
      %s168 = ssub.s32 %s10, 1
      %s169 = smul.u32 32, %s15
      %p170 = scmp.lt.s32.totalorder %s169, 95
      %s171 = scalar_select %p170, %s169, 95
      %s172 = smul.addr %s171, 8
      %s173 = scalar_lea.vmem %s0, %s172
      %p174 = pneg %p36
      %p175 = pneg %p33
      %p176 = pneg %p57
      %p177 = pneg %p54
      %p178 = pneg %p78
      %p179 = pneg %p75
      %p180 = pneg %p99
      %p181 = pneg %p96
      %p182 = pneg %p125
      %p183 = pneg %p122
      %s184 = smul.u32 32, %s15
      %p185 = scmp.lt.s32.totalorder %s184, 95
      %s186 = scalar_select %p185, %s184, 95
      %s187 = smul.addr %s186, 8
      %s188 = scalar_lea.vmem %s4, %s187
      %s189 = smul.u32 32, %s15
      %p190 = scmp.lt.s32.totalorder %s189, 95
      %s191 = scalar_select %p190, %s189, 95
      %s192 = smul.addr %s191, 8
      %s193 = scalar_lea.vmem %s0, %s192
      %s194 = smul.u32 32, %s15
      %s195 = smul.u32 32, %s15
      %p196 = scmp.lt.s32.totalorder %s195, 95
      %s197 = scalar_select %p196, %s195, 95
      %s198 = smul.addr %s197, 8
      %s199 = scalar_lea.vmem %s4, %s198
      %s200 = smul.u32 32, %s15
      %p201 = scmp.eq.s32.totalorder %s15, 0
      // Predicated region
      $region37: #{tpu_custom_call.1} parent=35 // pred_check
        %p202 = pneg %p201
      $region38: #{tpu_custom_call.1} parent=35 // pred_check_branch
        %204 = sbr.rel (%p202) target = $region40
      $region39: #{tpu_custom_call.1} parent=35 // pred_region
        %vm205 = vcmask 517120
        %206 = vst.msk [vmem:[#allocation2] sm:$0x3] %vm205, 0.0
      $region40: #{tpu_custom_call.1} parent=35 // pred_fallthru
        _
      %v207 = vld [vmem:[%s1] sm:$0x1]
      %v208 = vld [vmem:[%s1 + $0x1] sm:$0x1]
      %v209 = vld [vmem:[%s2] sm:$0x1]
      %v210 = vld [vmem:[%s2 + $0x1] sm:$0x1]
      %v211 = vld [vmem:[%s3] sm:$0x1]
      %v212 = vld [vmem:[%s3 + $0x1] sm:$0x1]
      %v213 = vld [vmem:[#allocation2] sm:$0x1]
      %v214 = vld [vmem:[#allocation2 + $0x1] sm:$0x1]
      loop: start=0, step=1, limit=32
      $region41: #{tpu_custom_call.1} parent=35 // loop_pre_header
        _
      $region42: #{tpu_custom_call.1} parent=35 // loop_header
        %s216 = sphi 0, %s220
        %p217 = scmp.ge.s32.totalorder %s216, 32
        %v221 = vphi %v213, %v474
        %v222 = vphi %v214, %v480
      $region43: #{tpu_custom_call.1} parent=35 // loop_header_branch
        %219 = sbr.rel (%p217) target = $region47
      $region44: #{tpu_custom_call.1} parent=35 // loop_body
        %s223 = smul.u32 %s216, 8
        %s224 = scalar_lea.vmem %s199, %s223
        %vm225 = vcmask 0
        %226 = vst.msk [vmem:[%s224] sm:$0x1] %vm225, %v221
        %v227 = vmul.f32 %v221, %v207
        %v228 = vmul.f32 %v222, %v208
        %v229 = vadd.f32 %v227, %v228
        %s230 = scalar_lea.vmem %s193, %s223
        %v231 = vld [vmem:[%s230] sm:$0x1]
        %v232 = vadd.f32 %v229, %v231
        %v233 = vmax.f32 %v232, 0.0
        %v234 = vmul.f32 %v233, %v209
        %vm235 = vcmask 516096
        %v236 = vsel %vm235, %v234, 0.0
        %237 = vadd.xlane.f32.xlu0 %v236
        %v238 = vpop.xlane.xlu0 %237
        %v239 = vadd.f32 %v238, %v211
        %v240 = vmul.f32 %v233, %v210
        %v241 = vsel %vm235, %v240, 0.0
        %242 = vadd.xlane.f32.xlu0 %v241
        %v243 = vpop.xlane.xlu0 %242
        %v244 = vadd.f32 %v243, %v212
        %246 = vset.pattern.permute.xlu0 0
        %247 = vperm.xlu0 %246, %v239
        %v248 = vpop.permute.xlu0 %247
        %v250 = vadd.f32 %v221, %v248
        %252 = vset.pattern.permute.xlu0 0
        %253 = vperm.xlu0 %252, %v244
        %v254 = vpop.permute.xlu0 %253
        %v256 = vadd.f32 %v222, %v254
        %s257 = sadd.s32 %s223, 1
        %s258 = scalar_lea.vmem %s199, %s257
        %259 = vst.msk [vmem:[%s258] sm:$0x1] %vm225, %v250
        %v260 = vmul.f32 %v250, %v207
        %v261 = vmul.f32 %v256, %v208
        %v262 = vadd.f32 %v260, %v261
        %s263 = scalar_lea.vmem %s193, %s257
        %v264 = vld [vmem:[%s263] sm:$0x1]
        %v265 = vadd.f32 %v262, %v264
        %v266 = vmax.f32 %v265, 0.0
        %v267 = vmul.f32 %v266, %v209
        %v268 = vsel %vm235, %v267, 0.0
        %269 = vadd.xlane.f32.xlu0 %v268
        %v270 = vpop.xlane.xlu0 %269
        %v271 = vadd.f32 %v270, %v211
        %v272 = vmul.f32 %v266, %v210
        %v273 = vsel %vm235, %v272, 0.0
        %274 = vadd.xlane.f32.xlu0 %v273
        %v275 = vpop.xlane.xlu0 %274
        %v276 = vadd.f32 %v275, %v212
        %278 = vset.pattern.permute.xlu0 0
        %279 = vperm.xlu0 %278, %v271
        %v280 = vpop.permute.xlu0 %279
        %v282 = vadd.f32 %v250, %v280
        %284 = vset.pattern.permute.xlu0 0
        %285 = vperm.xlu0 %284, %v276
        %v286 = vpop.permute.xlu0 %285
        %v288 = vadd.f32 %v256, %v286
        %s289 = sadd.s32 %s223, 2
        %s290 = scalar_lea.vmem %s199, %s289
        %291 = vst.msk [vmem:[%s290] sm:$0x1] %vm225, %v282
        %v292 = vmul.f32 %v282, %v207
        %v293 = vmul.f32 %v288, %v208
        %v294 = vadd.f32 %v292, %v293
        %s295 = scalar_lea.vmem %s193, %s289
        %v296 = vld [vmem:[%s295] sm:$0x1]
        %v297 = vadd.f32 %v294, %v296
        %v298 = vmax.f32 %v297, 0.0
        %v299 = vmul.f32 %v298, %v209
        %v300 = vsel %vm235, %v299, 0.0
        %301 = vadd.xlane.f32.xlu0 %v300
        %v302 = vpop.xlane.xlu0 %301
        %v303 = vadd.f32 %v302, %v211
        %v304 = vmul.f32 %v298, %v210
        %v305 = vsel %vm235, %v304, 0.0
        %306 = vadd.xlane.f32.xlu0 %v305
        %v307 = vpop.xlane.xlu0 %306
        %v308 = vadd.f32 %v307, %v212
        %310 = vset.pattern.permute.xlu0 0
        %311 = vperm.xlu0 %310, %v303
        %v312 = vpop.permute.xlu0 %311
        %v314 = vadd.f32 %v282, %v312
        %316 = vset.pattern.permute.xlu0 0
        %317 = vperm.xlu0 %316, %v308
        %v318 = vpop.permute.xlu0 %317
        %v320 = vadd.f32 %v288, %v318
        %s321 = sadd.s32 %s223, 3
        %s322 = scalar_lea.vmem %s199, %s321
        %323 = vst.msk [vmem:[%s322] sm:$0x1] %vm225, %v314
        %v324 = vmul.f32 %v314, %v207
        %v325 = vmul.f32 %v320, %v208
        %v326 = vadd.f32 %v324, %v325
        %s327 = scalar_lea.vmem %s193, %s321
        %v328 = vld [vmem:[%s327] sm:$0x1]
        %v329 = vadd.f32 %v326, %v328
        %v330 = vmax.f32 %v329, 0.0
        %v331 = vmul.f32 %v330, %v209
        %v332 = vsel %vm235, %v331, 0.0
        %333 = vadd.xlane.f32.xlu0 %v332
        %v334 = vpop.xlane.xlu0 %333
        %v335 = vadd.f32 %v334, %v211
        %v336 = vmul.f32 %v330, %v210
        %v337 = vsel %vm235, %v336, 0.0
        %338 = vadd.xlane.f32.xlu0 %v337
        %v339 = vpop.xlane.xlu0 %338
        %v340 = vadd.f32 %v339, %v212
        %342 = vset.pattern.permute.xlu0 0
        %343 = vperm.xlu0 %342, %v335
        %v344 = vpop.permute.xlu0 %343
        %v346 = vadd.f32 %v314, %v344
        %348 = vset.pattern.permute.xlu0 0
        %349 = vperm.xlu0 %348, %v340
        %v350 = vpop.permute.xlu0 %349
        %v352 = vadd.f32 %v320, %v350
        %s353 = sadd.s32 %s223, 4
        %s354 = scalar_lea.vmem %s199, %s353
        %355 = vst.msk [vmem:[%s354] sm:$0x1] %vm225, %v346
        %v356 = vmul.f32 %v346, %v207
        %v357 = vmul.f32 %v352, %v208
        %v358 = vadd.f32 %v356, %v357
        %s359 = scalar_lea.vmem %s193, %s353
        %v360 = vld [vmem:[%s359] sm:$0x1]
        %v361 = vadd.f32 %v358, %v360
        %v362 = vmax.f32 %v361, 0.0
        %v363 = vmul.f32 %v362, %v209
        %v364 = vsel %vm235, %v363, 0.0
        %365 = vadd.xlane.f32.xlu0 %v364
        %v366 = vpop.xlane.xlu0 %365
        %v367 = vadd.f32 %v366, %v211
        %v368 = vmul.f32 %v362, %v210
        %v369 = vsel %vm235, %v368, 0.0
        %370 = vadd.xlane.f32.xlu0 %v369
        %v371 = vpop.xlane.xlu0 %370
        %v372 = vadd.f32 %v371, %v212
        %374 = vset.pattern.permute.xlu0 0
        %375 = vperm.xlu0 %374, %v367
        %v376 = vpop.permute.xlu0 %375
        %v378 = vadd.f32 %v346, %v376
        %380 = vset.pattern.permute.xlu0 0
        %381 = vperm.xlu0 %380, %v372
        %v382 = vpop.permute.xlu0 %381
        %v384 = vadd.f32 %v352, %v382
        %s385 = sadd.s32 %s223, 5
        %s386 = scalar_lea.vmem %s199, %s385
        %387 = vst.msk [vmem:[%s386] sm:$0x1] %vm225, %v378
        %v388 = vmul.f32 %v378, %v207
        %v389 = vmul.f32 %v384, %v208
        %v390 = vadd.f32 %v388, %v389
        %s391 = scalar_lea.vmem %s193, %s385
        %v392 = vld [vmem:[%s391] sm:$0x1]
        %v393 = vadd.f32 %v390, %v392
        %v394 = vmax.f32 %v393, 0.0
        %v395 = vmul.f32 %v394, %v209
        %v396 = vsel %vm235, %v395, 0.0
        %397 = vadd.xlane.f32.xlu0 %v396
        %v398 = vpop.xlane.xlu0 %397
        %v399 = vadd.f32 %v398, %v211
        %v400 = vmul.f32 %v394, %v210
        %v401 = vsel %vm235, %v400, 0.0
        %402 = vadd.xlane.f32.xlu0 %v401
        %v403 = vpop.xlane.xlu0 %402
        %v404 = vadd.f32 %v403, %v212
        %406 = vset.pattern.permute.xlu0 0
        %407 = vperm.xlu0 %406, %v399
        %v408 = vpop.permute.xlu0 %407
        %v410 = vadd.f32 %v378, %v408
        %412 = vset.pattern.permute.xlu0 0
        %413 = vperm.xlu0 %412, %v404
        %v414 = vpop.permute.xlu0 %413
        %v416 = vadd.f32 %v384, %v414
        %s417 = sadd.s32 %s223, 6
        %s418 = scalar_lea.vmem %s199, %s417
        %419 = vst.msk [vmem:[%s418] sm:$0x1] %vm225, %v410
        %v420 = vmul.f32 %v410, %v207
        %v421 = vmul.f32 %v416, %v208
        %v422 = vadd.f32 %v420, %v421
        %s423 = scalar_lea.vmem %s193, %s417
        %v424 = vld [vmem:[%s423] sm:$0x1]
        %v425 = vadd.f32 %v422, %v424
        %v426 = vmax.f32 %v425, 0.0
        %v427 = vmul.f32 %v426, %v209
        %v428 = vsel %vm235, %v427, 0.0
        %429 = vadd.xlane.f32.xlu0 %v428
        %v430 = vpop.xlane.xlu0 %429
        %v431 = vadd.f32 %v430, %v211
        %v432 = vmul.f32 %v426, %v210
        %v433 = vsel %vm235, %v432, 0.0
        %434 = vadd.xlane.f32.xlu0 %v433
        %v435 = vpop.xlane.xlu0 %434
        %v436 = vadd.f32 %v435, %v212
        %438 = vset.pattern.permute.xlu0 0
        %439 = vperm.xlu0 %438, %v431
        %v440 = vpop.permute.xlu0 %439
        %v442 = vadd.f32 %v410, %v440
        %444 = vset.pattern.permute.xlu0 0
        %445 = vperm.xlu0 %444, %v436
        %v446 = vpop.permute.xlu0 %445
        %v448 = vadd.f32 %v416, %v446
        %s449 = sadd.s32 %s223, 7
        %s450 = scalar_lea.vmem %s199, %s449
        %451 = vst.msk [vmem:[%s450] sm:$0x1] %vm225, %v442
        %v452 = vmul.f32 %v442, %v207
        %v453 = vmul.f32 %v448, %v208
        %v454 = vadd.f32 %v452, %v453
        %s455 = scalar_lea.vmem %s193, %s449
        %v456 = vld [vmem:[%s455] sm:$0x1]
        %v457 = vadd.f32 %v454, %v456
        %v458 = vmax.f32 %v457, 0.0
        %v459 = vmul.f32 %v458, %v209
        %v460 = vsel %vm235, %v459, 0.0
        %461 = vadd.xlane.f32.xlu0 %v460
        %v462 = vpop.xlane.xlu0 %461
        %v463 = vadd.f32 %v462, %v211
        %v464 = vmul.f32 %v458, %v210
        %v465 = vsel %vm235, %v464, 0.0
        %466 = vadd.xlane.f32.xlu0 %v465
        %v467 = vpop.xlane.xlu0 %466
        %v468 = vadd.f32 %v467, %v212
        %470 = vset.pattern.permute.xlu0 0
        %471 = vperm.xlu0 %470, %v463
        %v472 = vpop.permute.xlu0 %471
        %v474 = vadd.f32 %v442, %v472
        %476 = vset.pattern.permute.xlu0 0
        %477 = vperm.xlu0 %476, %v468
        %v478 = vpop.permute.xlu0 %477
        %v480 = vadd.f32 %v448, %v478
      $region45: #{tpu_custom_call.1} parent=35 // loop_footer
        %s220 = sadd.s32 1, %s216
      $region46: #{tpu_custom_call.1} parent=35 // loop_footer_branch
        %215 = sbr.rel target = $region42
      $region47: #{tpu_custom_call.1} parent=35 // loop_exit
        _
      %vm481 = vcmask 516096
      %482 = vst.msk [vmem:[#allocation2] sm:$0x1] %vm481, %v221
      %483 = vst.msk [vmem:[#allocation2 + $0x1] sm:$0x1] %vm481, %v222
      %s484 = smul.u32 32, %s15
      %p485 = scmp.lt.s32.totalorder %s484, 95
      %s486 = scalar_select %p485, %s484, 95
      %s487 = smul.addr %s486, 8
      %s488 = scalar_lea.vmem %s4, %s487
      // Predicated region
      $region48: #{tpu_custom_call.1} parent=35 // pred_check
        %p489 = pneg %p122
      $region49: #{tpu_custom_call.1} parent=35 // pred_check_branch
        %491 = sbr.rel (%p489) target = $region51
      $region50: #{tpu_custom_call.1} parent=35 // pred_region
        %s492 = smul.u32 32, %s15
      $region51: #{tpu_custom_call.1} parent=35 // pred_fallthru
        _
    $region36: #{tpu_custom_call.1} parent=5 // pred_fallthru
      _
    %p493 = scmp.le.s32.totalorder 2, %s10
    // Predicated region
    $region52: #{tpu_custom_call.1} parent=5 // pred_check
      %p494 = pneg %p493
    $region53: #{tpu_custom_call.1} parent=5 // pred_check_branch
      %496 = sbr.rel (%p494) target = $region55
    $region54: #{tpu_custom_call.1} parent=5 // pred_region
      %s497 = ssub.s32 %s10, 2
      // Predicated region
      $region56: #{tpu_custom_call.1} parent=54 // pred_check
        %p498 = pneg %p128
      $region57: #{tpu_custom_call.1} parent=54 // pred_check_branch
        %500 = sbr.rel (%p498) target = $region59
      $region58: #{tpu_custom_call.1} parent=54 // pred_region
        %s501 = smul.u32 32, %s16
        %p502 = scmp.lt.s32.totalorder %s501, 95
        %s503 = scalar_select %p502, %s501, 95
        %s504 = smul.addr %s503, 8
        %s505 = scalar_lea.vmem %s4, %s504
      $region59: #{tpu_custom_call.1} parent=54 // pred_fallthru
        _
    $region55: #{tpu_custom_call.1} parent=5 // pred_fallthru
      _
  $region6: #{tpu_custom_call.1} parent=0 // loop_footer
    %s14 = sadd.s32 1, %s10
  $region7: #{tpu_custom_call.1} parent=0 // loop_footer_branch
    %9 = sbr.rel target = $region3
  $region8: #{tpu_custom_call.1} parent=0 // loop_exit
    _

</llo_original>
